<compile_context>
chip_gen: v7x
topology: tpu7x:2x2x1
jax: 0.10.0
libtpu: 0.0.40
codegen_flags: <defaults>
</compile_context>

<pallas_src>
import functools
import math

import jax
import jax.numpy as jnp
from jax.experimental import pallas as pl
from jax.experimental.pallas import tpu as pltpu


_LANES = 128          # lane-dense last dim (full vreg width, unmasked stores)
_MAX_TILE_ROWS = 512  # (512, 128) f32 block = 256 KiB -> ~1 MiB with in/out
                      # double buffering; well under scoped VMEM on all chips


def _mix32(v):
    """lowbias32 / splitmix-style uint32 -> uint32 integer hash."""
    v = v ^ (v >> 16)
    v = v * jnp.uint32(0x7FEB352D)
    v = v ^ (v >> 15)
    v = v * jnp.uint32(0x846CA68B)
    v = v ^ (v >> 16)
    return v


def _bits_to_open_unit(bits):
    """uint32 -> float32 uniform in (0, 1]  (safe for log)."""
    return ((bits >> 8).astype(jnp.int32).astype(jnp.float32) + 1.0) * jnp.float32(
        1.0 / (1 << 24)
    )


def _bits_to_half_unit(bits):
    """uint32 -> float32 uniform in [0, 1)."""
    return (bits >> 8).astype(jnp.int32).astype(jnp.float32) * jnp.float32(
        1.0 / (1 << 24)
    )


def noise_kernel(seed_ref, x_ref, o_ref, *, intensity):
    tile_r, cols = x_ref.shape
    pid = pl.program_id(0)

    # Each counter produces a (z1, z2) Box-Muller pair -> generate for half
    # the block and concatenate.  Prefer splitting along sublanes (rows) so
    # intermediates stay full 128-lane wide.
    if tile_r % 2 == 0:
        half_shape = (tile_r // 2, cols)
        cat_axis = 0
    else:
        half_shape = (tile_r, cols // 2)
        cat_axis = 1
    hr, hc = half_shape
    n_half = hr * hc

    row = jax.lax.broadcasted_iota(jnp.int32, half_shape, 0)
    col = jax.lax.broadcasted_iota(jnp.int32, half_shape, 1)
    # Globally unique counter per half-element (unique per tile and per core).
    lin = (row * hc + col).astype(jnp.uint32) + pid.astype(jnp.uint32) * jnp.uint32(
        n_half
    )

    off = _mix32(seed_ref[0].astype(jnp.uint32) * jnp.uint32(0x9E3779B9) + jnp.uint32(1))
    b1 = _mix32(lin * jnp.uint32(2) + off)
    b2 = _mix32(lin * jnp.uint32(2) + jnp.uint32(1) + off)

    u1 = _bits_to_open_unit(b1)   # (0, 1]
    u2 = _bits_to_half_unit(b2)   # [0, 1)

    # Box-Muller, using both independent outputs of the transform.
    r = jnp.sqrt(jnp.float32(-2.0) * jnp.log(u1))
    theta = jnp.float32(2.0 * math.pi) * u2
    z = jnp.concatenate([r * jnp.cos(theta), r * jnp.sin(theta)], axis=cat_axis)

    # Keep the arithmetic in f32; single cast at the store.
    o_ref[...] = (
        x_ref[...].astype(jnp.float32) + z * jnp.float32(intensity)
    ).astype(o_ref.dtype)


def noise_forward(x, seed, intensity=0.1):
    """JAX/Pallas equivalent of Noise(I=intensity).forward(x)."""
    orig_shape = x.shape
    orig_dtype = x.dtype
    total = x.size

    cols = _LANES
    rows = pl.cdiv(total, cols)
    tile_r = rows if rows <= _MAX_TILE_ROWS else _MAX_TILE_ROWS
    n_tiles = pl.cdiv(rows, tile_r)
    padded_rows = n_tiles * tile_r
    padded = padded_rows * cols

    flat = x.reshape(-1)
    if padded != total:
        flat = jnp.pad(flat, (0, padded - total))
    x2 = flat.reshape(padded_rows, cols)

    kernel = functools.partial(noise_kernel, intensity=float(intensity))

    out2 = pl.pallas_call(
        kernel,
        out_shape=jax.ShapeDtypeStruct((padded_rows, cols), orig_dtype),
        grid_spec=pltpu.PrefetchScalarGridSpec(
            num_scalar_prefetch=1,            # seed scalar lands in SMEM
            grid=(n_tiles,),
            in_specs=[pl.BlockSpec((tile_r, cols), lambda i, s: (i, 0))],
            out_specs=pl.BlockSpec((tile_r, cols), lambda i, s: (i, 0)),
        ),
        compiler_params=pltpu.CompilerParams(
            dimension_semantics=("parallel",),   # embarrassingly parallel rows
        ),
    )(jnp.asarray([seed], dtype=jnp.int32), x2)

    return out2.reshape(-1)[:total].reshape(orig_shape)


if __name__ == "__main__":
    key = jax.random.PRNGKey(0)
    # Small NCHW input consistent with the module's elementwise forward.
    x = jax.random.normal(key, (2, 4, 16, 16), dtype=jnp.float32)

    y = noise_forward(x, seed=0, intensity=0.1)
    y = jax.block_until_ready(y)

    assert y.shape == x.shape and y.dtype == x.dtype

    # Sanity: added noise should be ~N(0, 0.1^2), i.i.d. (non-degenerate).
    noise = y - x
    n_std = float(jnp.std(noise))
    n_mean = float(jnp.mean(noise))
    assert 0.05 < n_std < 0.2, f"unexpected noise std {n_std}"
    assert abs(n_mean) < 0.05, f"unexpected noise mean {n_mean}"

    print("KERNEL_OK")
</pallas_src>

<mosaic_0001>
module attributes {stable_mosaic.version = 11 : i64} {
  func.func @noise_kernel(%arg0: i32, %arg1: memref<1xi32, #tpu.memory_space<smem>>, %arg2: memref<16x128xf32, #tpu.memory_space<vmem>>, %arg3: memref<16x128xf32, #tpu.memory_space<vmem>>) attributes {dimension_semantics = [#tpu.dimension_semantics<parallel>], iteration_bounds = array<i64: 1>, scalar_prefetch = 1 : i64, scratch_operands = 0 : i64, tpu.core_type = #tpu.core_type<tc>, window_params = [{transform_indices = @transform_0, window_bounds = array<i64: 16, 128>}, {transform_indices = @transform_1, window_bounds = array<i64: 16, 128>}]} {
    %0 = tpu.iota {dimensions = array<i32: 0>} : vector<8x128xi32>
    %1 = tpu.iota {dimensions = array<i32: 1>} : vector<8x128xi32>
    %c128_i32 = arith.constant 128 : i32
    %2 = vector.broadcast %c128_i32 : i32 to vector<8x128xi32>
    %3 = arith.muli %0, %2 : vector<8x128xi32>
    %4 = arith.addi %3, %1 : vector<8x128xi32>
    %c1024_i32 = arith.constant 1024 : i32
    %5 = arith.muli %arg0, %c1024_i32 : i32
    %6 = vector.broadcast %5 : i32 to vector<8x128xi32>
    %7 = arith.addi %4, %6 : vector<8x128xi32>
    %c0 = arith.constant 0 : index
    %8 = memref.load %arg1[%c0] : memref<1xi32, #tpu.memory_space<smem>>
    %c-1640531527_i32 = arith.constant -1640531527 : i32
    %9 = arith.muli %8, %c-1640531527_i32 : i32
    %c1_i32 = arith.constant 1 : i32
    %10 = arith.addi %9, %c1_i32 : i32
    %c16_i32 = arith.constant 16 : i32
    %11 = arith.shrui %10, %c16_i32 : i32
    %12 = arith.xori %10, %11 : i32
    %c2146121005_i32 = arith.constant 2146121005 : i32
    %13 = arith.muli %12, %c2146121005_i32 : i32
    %c15_i32 = arith.constant 15 : i32
    %14 = arith.shrui %13, %c15_i32 : i32
    %15 = arith.xori %13, %14 : i32
    %c-2073254261_i32 = arith.constant -2073254261 : i32
    %16 = arith.muli %15, %c-2073254261_i32 : i32
    %c16_i32_0 = arith.constant 16 : i32
    %17 = arith.shrui %16, %c16_i32_0 : i32
    %18 = arith.xori %16, %17 : i32
    %c2_i32 = arith.constant 2 : i32
    %19 = vector.broadcast %c2_i32 : i32 to vector<8x128xi32>
    %20 = arith.muli %7, %19 : vector<8x128xi32>
    %21 = vector.broadcast %18 : i32 to vector<8x128xi32>
    %22 = arith.addi %20, %21 : vector<8x128xi32>
    %c16_i32_1 = arith.constant 16 : i32
    %23 = vector.broadcast %c16_i32_1 : i32 to vector<8x128xi32>
    %24 = arith.shrui %22, %23 : vector<8x128xi32>
    %25 = arith.xori %22, %24 : vector<8x128xi32>
    %c2146121005_i32_2 = arith.constant 2146121005 : i32
    %26 = vector.broadcast %c2146121005_i32_2 : i32 to vector<8x128xi32>
    %27 = arith.muli %25, %26 : vector<8x128xi32>
    %c15_i32_3 = arith.constant 15 : i32
    %28 = vector.broadcast %c15_i32_3 : i32 to vector<8x128xi32>
    %29 = arith.shrui %27, %28 : vector<8x128xi32>
    %30 = arith.xori %27, %29 : vector<8x128xi32>
    %c-2073254261_i32_4 = arith.constant -2073254261 : i32
    %31 = vector.broadcast %c-2073254261_i32_4 : i32 to vector<8x128xi32>
    %32 = arith.muli %30, %31 : vector<8x128xi32>
    %c16_i32_5 = arith.constant 16 : i32
    %33 = vector.broadcast %c16_i32_5 : i32 to vector<8x128xi32>
    %34 = arith.shrui %32, %33 : vector<8x128xi32>
    %35 = arith.xori %32, %34 : vector<8x128xi32>
    %c2_i32_6 = arith.constant 2 : i32
    %36 = vector.broadcast %c2_i32_6 : i32 to vector<8x128xi32>
    %37 = arith.muli %7, %36 : vector<8x128xi32>
    %c1_i32_7 = arith.constant 1 : i32
    %38 = vector.broadcast %c1_i32_7 : i32 to vector<8x128xi32>
    %39 = arith.addi %37, %38 : vector<8x128xi32>
    %40 = vector.broadcast %18 : i32 to vector<8x128xi32>
    %41 = arith.addi %39, %40 : vector<8x128xi32>
    %c16_i32_8 = arith.constant 16 : i32
    %42 = vector.broadcast %c16_i32_8 : i32 to vector<8x128xi32>
    %43 = arith.shrui %41, %42 : vector<8x128xi32>
    %44 = arith.xori %41, %43 : vector<8x128xi32>
    %c2146121005_i32_9 = arith.constant 2146121005 : i32
    %45 = vector.broadcast %c2146121005_i32_9 : i32 to vector<8x128xi32>
    %46 = arith.muli %44, %45 : vector<8x128xi32>
    %c15_i32_10 = arith.constant 15 : i32
    %47 = vector.broadcast %c15_i32_10 : i32 to vector<8x128xi32>
    %48 = arith.shrui %46, %47 : vector<8x128xi32>
    %49 = arith.xori %46, %48 : vector<8x128xi32>
    %c-2073254261_i32_11 = arith.constant -2073254261 : i32
    %50 = vector.broadcast %c-2073254261_i32_11 : i32 to vector<8x128xi32>
    %51 = arith.muli %49, %50 : vector<8x128xi32>
    %c16_i32_12 = arith.constant 16 : i32
    %52 = vector.broadcast %c16_i32_12 : i32 to vector<8x128xi32>
    %53 = arith.shrui %51, %52 : vector<8x128xi32>
    %54 = arith.xori %51, %53 : vector<8x128xi32>
    %c8_i32 = arith.constant 8 : i32
    %55 = vector.broadcast %c8_i32 : i32 to vector<8x128xi32>
    %56 = arith.shrui %35, %55 : vector<8x128xi32>
    %57 = arith.sitofp %56 : vector<8x128xi32> to vector<8x128xf32>
    %cst = arith.constant 1.000000e+00 : f32
    %58 = vector.broadcast %cst : f32 to vector<8x128xf32>
    %59 = arith.addf %57, %58 : vector<8x128xf32>
    %cst_13 = arith.constant 5.96046448E-8 : f32
    %60 = vector.broadcast %cst_13 : f32 to vector<8x128xf32>
    %61 = arith.mulf %59, %60 : vector<8x128xf32>
    %c8_i32_14 = arith.constant 8 : i32
    %62 = vector.broadcast %c8_i32_14 : i32 to vector<8x128xi32>
    %63 = arith.shrui %54, %62 : vector<8x128xi32>
    %64 = arith.sitofp %63 : vector<8x128xi32> to vector<8x128xf32>
    %cst_15 = arith.constant 5.96046448E-8 : f32
    %65 = vector.broadcast %cst_15 : f32 to vector<8x128xf32>
    %66 = arith.mulf %64, %65 : vector<8x128xf32>
    %67 = math.log %61 : vector<8x128xf32>
    %cst_16 = arith.constant -2.000000e+00 : f32
    %68 = vector.broadcast %cst_16 : f32 to vector<8x128xf32>
    %69 = arith.mulf %68, %67 : vector<8x128xf32>
    %70 = math.sqrt %69 : vector<8x128xf32>
    %cst_17 = arith.constant 6.28318548 : f32
    %71 = vector.broadcast %cst_17 : f32 to vector<8x128xf32>
    %72 = arith.mulf %71, %66 : vector<8x128xf32>
    %73 = math.cos %72 : vector<8x128xf32>
    %74 = arith.mulf %70, %73 : vector<8x128xf32>
    %75 = math.sin %72 : vector<8x128xf32>
    %76 = arith.mulf %70, %75 : vector<8x128xf32>
    %77 = tpu.concatenate %74, %76 in 0 : vector<8x128xf32>, vector<8x128xf32> -> vector<16x128xf32>
    %c0_18 = arith.constant 0 : index
    %c0_19 = arith.constant 0 : index
    %78 = vector.load %arg2[%c0_18, %c0_19] : memref<16x128xf32, #tpu.memory_space<vmem>>, vector<16x128xf32>
    %cst_20 = arith.constant 1.000000e-01 : f32
    %79 = vector.broadcast %cst_20 : f32 to vector<16x128xf32>
    %80 = arith.mulf %77, %79 : vector<16x128xf32>
    %81 = arith.addf %78, %80 : vector<16x128xf32>
    %c0_21 = arith.constant 0 : index
    %c0_22 = arith.constant 0 : index
    %82 = vector.load %arg3[%c0_21, %c0_22] : memref<16x128xf32, #tpu.memory_space<vmem>>, vector<16x128xf32>
    tpu.vector_store %arg3[%c0_21, %c0_22], %81 {strides = array<i32>} : memref<16x128xf32, #tpu.memory_space<vmem>>, vector<16x128xf32>,
    return
  }
  func.func @transform_0(%arg0: i32, %arg1: memref<1xi32, #tpu.memory_space<smem>>) -> (i32, i32) {
    %c0_i32 = arith.constant 0 : i32
    %c0_i32_0 = arith.constant 0 : i32
    return %arg0, %c0_i32 : i32, i32
  }
  func.func @transform_1(%arg0: i32, %arg1: memref<1xi32, #tpu.memory_space<smem>>) -> (i32, i32) {
    %c0_i32 = arith.constant 0 : i32
    %c0_i32_0 = arith.constant 0 : i32
    return %arg0, %c0_i32 : i32, i32
  }
}

</mosaic_0001>

<llo_original>
// kernel: tpu_custom_call.1
$region0: #{tpu_custom_call.1}
  #allocation0 [shape = 'u32[]', space=smem, size = 0x4, offset = 0x4, fixed_abs, tag = 'smem constant byte address 0x4 - core index']
  #allocation1 [shape = 'u32[144,128]{1,0:T(1,128)}', space=vmem, size = 0x12000, scoped, tag = 'internal scratch']
  #allocation2 [shape = 's32[1]{0}', space=sflag, size = 0x4, scoped, tag = 'scoped memory for tpu_custom_call.1']
  #allocation3 [shape = 's32[1]{0:T(128)S(6)}', space=smem, size = 0x200, scoped, tag = 'prefetched SMEM operand 0']
  %s0 = inlined_call_operand.<no memory space> [shape: s32[1], index: 0, kind: input, shape index: {}]
  %s1 = inlined_call_operand.hbm [shape: f32[16,128], index: 1, kind: input, shape index: {}]
  %s2 = inlined_call_operand.hbm [shape: f32[16,128], index: 2, kind: output, shape index: {}]
  %s3 = sld [smem:[#allocation0]]
  $region18: #{tpu_custom_call.1} parent=0
    _
  %s5 = ssub.s32 1, %s3
  %s6 = scalar_select 0, %s5, %s3
  %7 = sst [smem:[#allocation3]] %s0
  $region1: #{tpu_custom_call.1} parent=0
    #allocation4 [shape = 'u8[8192]{0}', space=vmem, size = 0x2000, scoped, tag = 'input window, operand 1, single buffered']
    #allocation5 [shape = 's32[1]{0}', space=sflag, size = 0x4, scoped, tag = 'scoped memory for tpu_custom_call.1']
    #allocation6 [shape = 's32[1]{0}', space=sflag, size = 0x4, scoped, tag = 'scoped memory for tpu_custom_call.1']
    #allocation7 [shape = 'u8[8192]{0}', space=vmem, size = 0x2000, scoped, tag = 'output window, operand 0, single buffered']
    %8 = vsyncpa [#allocation5], 0
    %9 = vsyncpa [#allocation6], 0
    // Predicated region
    $region2: #{tpu_custom_call.1} parent=1 // pred_check
      _
    $region3: #{tpu_custom_call.1} parent=1 // pred_check_branch
      %11 = sbr.rel (0) target = $region5
    $region4: #{tpu_custom_call.1} parent=1 // pred_region
      %s13 = ssub.s32 256, 256
      %14 = vsyncadd [#allocation5], %s13
      %s15 = sshll.u32 [#allocation4], 4
      %s16 = int_to_ptr.vmem [resolvable:$true] %s15
      %21 = dma.hbm_to_vmem [thread:$0]  %s1, 256, %s16, [#allocation5], 128, 128, 8
    $region5: #{tpu_custom_call.1} parent=1 // pred_fallthru
      _
    // Predicated region
    $region6: #{tpu_custom_call.1} parent=1 // pred_check
      _
    $region7: #{tpu_custom_call.1} parent=1 // pred_check_branch
      %23 = sbr.rel (0) target = $region9
    $region8: #{tpu_custom_call.1} parent=1 // pred_region
      %24 = dma.done [#allocation5], 256
    $region9: #{tpu_custom_call.1} parent=1 // pred_fallthru
      _
    %v25 = vlaneseq
    %v26 = vshrl.u32 %v25, 7
    %v27 = vlaneseq
    %v28 = vand.u32 %v27, 127
    %v29 = vmul.u32 %v26, 128
    %v30 = vadd.s32 %v29, %v28
    %s31 = smul.u32 0, 1024
    %v32 = vstv %s31
    %v33 = vadd.s32 %v30, %v32
    %s34 = sld [smem:[#allocation3]]
    %s35 = smul.u32 %s34, 2654435769
    %s36 = sadd.s32 %s35, 1
    %s37 = sshrl.u32 %s36, 16
    %s38 = sxor.u32 %s36, %s37
    %s39 = smul.u32 %s38, 2146121005
    %s40 = sshrl.u32 %s39, 15
    %s41 = sxor.u32 %s39, %s40
    %s42 = smul.u32 %s41, 2221713035
    %s43 = sshrl.u32 %s42, 16
    %s44 = sxor.u32 %s42, %s43
    %v45 = vmul.u32 %v33, 2
    %v46 = vstv %s44
    %v47 = vadd.s32 %v45, %v46
    %v48 = vshrl.u32 %v47, 16
    %v49 = vxor.u32 %v47, %v48
    %v50 = vmul.u32 %v49, 2146121005
    %v51 = vshrl.u32 %v50, 15
    %v52 = vxor.u32 %v50, %v51
    %v53 = vmul.u32 %v52, 2221713035
    %v54 = vshrl.u32 %v53, 16
    %v55 = vxor.u32 %v53, %v54
    %v56 = vadd.s32 %v45, 1
    %v57 = vadd.s32 %v56, %v46
    %v58 = vshrl.u32 %v57, 16
    %v59 = vxor.u32 %v57, %v58
    %v60 = vmul.u32 %v59, 2146121005
    %v61 = vshrl.u32 %v60, 15
    %v62 = vxor.u32 %v60, %v61
    %v63 = vmul.u32 %v62, 2221713035
    %v64 = vshrl.u32 %v63, 16
    %v65 = vxor.u32 %v63, %v64
    %v66 = vshrl.u32 %v55, 8
    %v67 = vcvt.s32.f32 %v66
    %v68 = vadd.f32 %v67, 1.0
    %v69 = vmul.f32 %v68, 5.9604645e-08
    %v70 = vshrl.u32 %v65, 8
    %v71 = vcvt.s32.f32 %v70
    %v72 = vmul.f32 %v71, 5.9604645e-08
    %v73 = vlog2.pop %v69
    %v74 = vmul.f32 %v73, 0.6931472
    %v75 = vmul.f32 %v74, -2.0
    %v76 = vrsqrt.pop %v75
    %v77 = vmul.f32 %v75, %v76
    %vm78 = vcmp.eq.f32.partialorder %v75, inf
    %v79 = vsel %vm78, %v75, %v77
    %vm80 = vcmp.eq.f32.partialorder %v75, 0.0
    %v81 = vand.u32 %v75, 2147483648
    %v82 = vsel %vm80, %v81, %v79
    %v83 = vmul.f32 %v72, 6.2831855
    %v84 = vand.u32 2147483647, %v83
    %vm85 = vcmp.le.f32.partialorder %v84, 0.7853982
    %vm86 = vcmp.lt.s32.totalorder %v83, 0
    %v87 = vand.u32 %v83, 2139095040
    %v88 = vshrl.u32 %v87, 23
    %v89 = vsub.s32 %v88, 127
    %v90 = vand.u32 2147483647, %v83
    %v91 = vand.u32 %v90, 8388607
    %v92 = vor.u32 %v91, 8388608
    %v93 = vsub.s32 0, %v92
    %v94 = vadd.s32 %v89, 1
    %vm95 = vcmp.gt.s32.totalorder %v94, 0
    %v96 = vsel %vm95, %v94, 0
    %v97 = vshrl.u32 %v96, 5
    %v98 = vand.u32 %v96, 31
    %v99 = vsub.s32 32, %v98
    %v100 = vshrl.u32 683565275, %v99
    %v101 = vshll.u32 683565275, %v98
    %v102 = vshrl.u32 2475754826, %v99
    %v103 = vor.u32 %v101, %v102
    %v104 = vshll.u32 2475754826, %v98
    %v105 = vshrl.u32 2131351028, %v99
    %v106 = vor.u32 %v104, %v105
    %v107 = vshll.u32 2131351028, %v98
    %v108 = vshrl.u32 2102212464, %v99
    %v109 = vor.u32 %v107, %v108
    %v110 = vshll.u32 2102212464, %v98
    %v111 = vshrl.u32 920167782, %v99
    %v112 = vor.u32 %v110, %v111
    %v113 = vshll.u32 920167782, %v98
    %v114 = vshrl.u32 1326507024, %v99
    %v115 = vor.u32 %v113, %v114
    %vm116 = vcmp.lt.s32.totalorder %v97, 1
    %vm117 = vcmp.lt.s32.totalorder %v97, 2
    %vm118 = vcmp.lt.s32.totalorder %v97, 3
    %vm119 = vcmp.lt.s32.totalorder %v97, 4
    %v120 = vsel %vm116, %v100, %v103
    %v121 = vsel %vm119, %v109, 2102212464
    %v122 = vsel %vm118, %v106, %v121
    %v123 = vsel %vm117, %v120, %v122
    %v124 = vsel %vm116, %v103, %v106
    %v125 = vsel %vm119, %v112, 920167782
    %v126 = vsel %vm118, %v109, %v125
    %v127 = vsel %vm117, %v124, %v126
    %v128 = vsel %vm116, %v106, %v109
    %v129 = vsel %vm119, %v115, 1326507024
    %v130 = vsel %vm118, %v112, %v129
    %v131 = vsel %vm117, %v128, %v130
    %v132 = vshll.u32 %v92, 8
    %v133 = vmul.u32.u64.compose %v132, %v131
    %v134 = vextract.low.u32 %v133
    %v135 = vextract.high.u32 %v133
    %v136 = vmul.u32.u64.compose %v132, %v127
    %v137 = vextract.low.u32 %v136
    %v138 = vextract.high.u32 %v136
    %v139 = vmul.u32 %v132, %v123
    %v140 = vadd.s32 %v135, %v137
    %vm141 = vc.u32 %v135, %v137
    %v142 = vadd.s32 %v138, 1
    %v143 = vsel %vm141, %v142, %v138
    %v144 = vadd.s32 %v139, %v143
    %v145 = vadd.s32 %v144, 536870912
    %v146 = vshrl.u32 %v145, 30
    %v147 = vshll.u32 %v146, 30
    %v148 = vsub.s32 %v144, %v147
    %vm149 = vcmp.lt.s32.totalorder %v148, 0
    %v150 = vsub.s32 0, %v148
    %v151 = vsel %vm149, %v150, %v148
    %v152 = vclz %v151
    %v153 = vsub.s32 %v152, 2
    %vm154 = vcmp.gt.s32.totalorder 0, %v153
    %v155 = vsel %vm154, 0, %v153
    %v156 = vsub.s32 32, %v155
    %v157 = vshll.u32 %v148, %v155
    %v158 = vshrl.u32 %v140, %v156
    %v159 = vor.u32 %v157, %v158
    %v160 = vsub.s32 4294967266, %v155
    %v161 = vadd.s32 %v160, 127
    %v162 = vshll.u32 %v161, 23
    %v163 = vor.u32 4788187, %v162
    %v164 = vand.u32 2147483647, %v163
    %v166 = vcvt.s32.f32 %v159
    %v167 = vmul.f32 %v166, %v164
    %v168 = vxor.u32 %v167, 2147483648
    %v169 = vsel %vm86, %v168, %v167
    %v170 = vsub.s32 4, %v146
    %v171 = vsel %vm86, %v170, %v146
    %v172 = vsel %vm85, %v83, %v169
    %v173 = vsel %vm85, 0, %v171
    %v174 = vcosq.f32.pop %v172
    %v175 = vsinq.f32.pop %v172
    %vm176 = vweird.f32 %v83
    %v177 = vand.u32 %v173, 3
    %vm178 = vcmp.lt.s32.totalorder %v177, 2
    %vm179 = vcmp.eq.s32.totalorder %v177, 0
    %v180 = vxor.u32 %v175, 2147483648
    %v181 = vsel %vm179, %v174, %v180
    %vm182 = vcmp.eq.s32.totalorder %v177, 2
    %v183 = vxor.u32 %v174, 2147483648
    %v184 = vsel %vm182, %v183, %v175
    %v185 = vsel %vm178, %v181, %v184
    %v186 = vsel %vm176, nan, %v185
    %v187 = vmul.f32 %v82, %v186
    %v188 = vand.u32 2147483647, %v83
    %vm189 = vcmp.le.f32.partialorder %v188, 0.7853982
    %vm190 = vcmp.lt.s32.totalorder %v83, 0
    %v191 = vand.u32 %v83, 2139095040
    %v192 = vshrl.u32 %v191, 23
    %v193 = vsub.s32 %v192, 127
    %v194 = vand.u32 2147483647, %v83
    %v195 = vand.u32 %v194, 8388607
    %v196 = vor.u32 %v195, 8388608
    %v197 = vsub.s32 0, %v196
    %v198 = vadd.s32 %v193, 1
    %vm199 = vcmp.gt.s32.totalorder %v198, 0
    %v200 = vsel %vm199, %v198, 0
    %v201 = vshrl.u32 %v200, 5
    %v202 = vand.u32 %v200, 31
    %v203 = vsub.s32 32, %v202
    %v204 = vshrl.u32 683565275, %v203
    %v205 = vshll.u32 683565275, %v202
    %v206 = vshrl.u32 2475754826, %v203
    %v207 = vor.u32 %v205, %v206
    %v208 = vshll.u32 2475754826, %v202
    %v209 = vshrl.u32 2131351028, %v203
    %v210 = vor.u32 %v208, %v209
    %v211 = vshll.u32 2131351028, %v202
    %v212 = vshrl.u32 2102212464, %v203
    %v213 = vor.u32 %v211, %v212
    %v214 = vshll.u32 2102212464, %v202
    %v215 = vshrl.u32 920167782, %v203
    %v216 = vor.u32 %v214, %v215
    %v217 = vshll.u32 920167782, %v202
    %v218 = vshrl.u32 1326507024, %v203
    %v219 = vor.u32 %v217, %v218
    %vm220 = vcmp.lt.s32.totalorder %v201, 1
    %vm221 = vcmp.lt.s32.totalorder %v201, 2
    %vm222 = vcmp.lt.s32.totalorder %v201, 3
    %vm223 = vcmp.lt.s32.totalorder %v201, 4
    %v224 = vsel %vm220, %v204, %v207
    %v225 = vsel %vm223, %v213, 2102212464
    %v226 = vsel %vm222, %v210, %v225
    %v227 = vsel %vm221, %v224, %v226
    %v228 = vsel %vm220, %v207, %v210
    %v229 = vsel %vm223, %v216, 920167782
    %v230 = vsel %vm222, %v213, %v229
    %v231 = vsel %vm221, %v228, %v230
    %v232 = vsel %vm220, %v210, %v213
    %v233 = vsel %vm223, %v219, 1326507024
    %v234 = vsel %vm222, %v216, %v233
    %v235 = vsel %vm221, %v232, %v234
    %v236 = vshll.u32 %v196, 8
    %v237 = vmul.u32.u64.compose %v236, %v235
    %v238 = vextract.low.u32 %v237
    %v239 = vextract.high.u32 %v237
    %v240 = vmul.u32.u64.compose %v236, %v231
    %v241 = vextract.low.u32 %v240
    %v242 = vextract.high.u32 %v240
    %v243 = vmul.u32 %v236, %v227
    %v244 = vadd.s32 %v239, %v241
    %vm245 = vc.u32 %v239, %v241
    %v246 = vadd.s32 %v242, 1
    %v247 = vsel %vm245, %v246, %v242
    %v248 = vadd.s32 %v243, %v247
    %v249 = vadd.s32 %v248, 536870912
    %v250 = vshrl.u32 %v249, 30
    %v251 = vshll.u32 %v250, 30
    %v252 = vsub.s32 %v248, %v251
    %vm253 = vcmp.lt.s32.totalorder %v252, 0
    %v254 = vsub.s32 0, %v252
    %v255 = vsel %vm253, %v254, %v252
    %v256 = vclz %v255
    %v257 = vsub.s32 %v256, 2
    %vm258 = vcmp.gt.s32.totalorder 0, %v257
    %v259 = vsel %vm258, 0, %v257
    %v260 = vsub.s32 32, %v259
    %v261 = vshll.u32 %v252, %v259
    %v262 = vshrl.u32 %v244, %v260
    %v263 = vor.u32 %v261, %v262
    %v264 = vsub.s32 4294967266, %v259
    %v265 = vadd.s32 %v264, 127
    %v266 = vshll.u32 %v265, 23
    %v267 = vor.u32 4788187, %v266
    %v268 = vand.u32 2147483647, %v267
    %v270 = vcvt.s32.f32 %v263
    %v271 = vmul.f32 %v270, %v268
    %v272 = vxor.u32 %v271, 2147483648
    %v273 = vsel %vm190, %v272, %v271
    %v274 = vsub.s32 4, %v250
    %v275 = vsel %vm190, %v274, %v250
    %v276 = vsel %vm189, %v83, %v273
    %v277 = vsel %vm189, 0, %v275
    %v278 = vcosq.f32.pop %v276
    %v279 = vsinq.f32.pop %v276
    %vm280 = vweird.f32 %v83
    %v281 = vadd.s32 %v277, 3
    %v282 = vand.u32 %v281, 3
    %vm283 = vcmp.lt.s32.totalorder %v282, 2
    %vm284 = vcmp.eq.s32.totalorder %v282, 0
    %v285 = vxor.u32 %v279, 2147483648
    %v286 = vsel %vm284, %v278, %v285
    %vm287 = vcmp.eq.s32.totalorder %v282, 2
    %v288 = vxor.u32 %v278, 2147483648
    %v289 = vsel %vm287, %v288, %v279
    %v290 = vsel %vm283, %v286, %v289
    %v291 = vsel %vm280, nan, %v290
    %v292 = vmul.f32 %v82, %v291
    %v293 = vld [vmem:[#allocation4] sm:$0xff]
    %v294 = vld [vmem:[#allocation4 + $0x8] sm:$0xff]
    %v295 = vmul.f32 %v187, 0.1
    %v296 = vmul.f32 %v292, 0.1
    %v297 = vadd.f32 %v293, %v295
    %v298 = vadd.f32 %v294, %v296
    %299 = vst [vmem:[#allocation7] sm:$0xff] %v297
    %300 = vst [vmem:[#allocation7 + $0x8] sm:$0xff] %v298
    // Predicated region
    $region10: #{tpu_custom_call.1} parent=1 // pred_check
      _
    $region11: #{tpu_custom_call.1} parent=1 // pred_check_branch
      %302 = sbr.rel (0) target = $region13
    $region12: #{tpu_custom_call.1} parent=1 // pred_region
      %s304 = ssub.s32 256, 256
      %305 = vsyncadd [#allocation6], %s304
      %s306 = sshll.u32 [#allocation7], 4
      %s307 = int_to_ptr.vmem [resolvable:$true] %s306
      %312 = dma.vmem_to_hbm [thread:$0]  %s307, 256, %s2, [#allocation6], 128, 128, 8
    $region13: #{tpu_custom_call.1} parent=1 // pred_fallthru
      _
    // Predicated region
    $region14: #{tpu_custom_call.1} parent=1 // pred_check
      _
    $region15: #{tpu_custom_call.1} parent=1 // pred_check_branch
      %314 = sbr.rel (0) target = $region17
    $region16: #{tpu_custom_call.1} parent=1 // pred_region
      %315 = dma.done [#allocation6], 256
    $region17: #{tpu_custom_call.1} parent=1 // pred_fallthru
      _
    %316 = vsyncpa [#allocation5], 1
    %317 = vsyncpa [#allocation6], 1

</llo_original>
